<compile_context>
chip_gen: v7x
topology: tpu7x:2x2x1
jax: 0.10.0
libtpu: 0.0.40
codegen_flags: <defaults>
</compile_context>

<pallas_src>
import functools

import jax
import jax.numpy as jnp
from jax.experimental import pallas as pl
from jax.experimental.pallas import tpu as pltpu

_LANE = 128
_TARGET_TILE_BYTES = 1 << 20  # ~1 MiB per input tile (double-buffered ~4 MiB)


def _round_up(x, m):
    return ((x + m - 1) // m) * m


def _num_tensorcores():
    """Trace-time TC count: only v7x-class chips have 2 TensorCores/chip."""
    try:
        kind = jax.devices()[0].device_kind.lower()
    except Exception:
        return 1
    return 2 if "v7" in kind else 1


def _tile_rows_for(rows, itemsize):
    """Largest tile up to ~1 MiB, rounded to the dtype's sublane packing."""
    sub = max(32 // itemsize, 8)          # 8 for f32, 16 for bf16, 32 for int8
    max_rows = max((_TARGET_TILE_BYTES // (_LANE * itemsize)) // sub * sub, sub)
    return min(max_rows, _round_up(rows, sub))


def _masked_accumulate(d, rows, tile_rows, tile_start, needs_mask, add_fn):
    """Accumulate one tile; mask rows past `rows` only on the partial tile.

    The mask (iota + compare + single select on d) only exists when the
    trace-time `needs_mask` flag is set, and at runtime only runs on the one
    ragged tile / clamped padding tiles. Full tiles pay zero extra VPU work.
    """
    if needs_mask:
        @pl.when(tile_start + tile_rows > rows)
        def _():
            row_ids = tile_start + jax.lax.broadcasted_iota(
                jnp.int32, d.shape, 0)
            add_fn(jnp.where(row_ids < rows, d, 0.0))

        @pl.when(tile_start + tile_rows <= rows)
        def _():
            add_fn(d)
    else:
        add_fn(d)


def _fused_loss_kernel(rows, tile_rows, inv_n, needs_mask,
                       w_ref, pred_ref, targ_ref, loss_ref, abs_acc, sq_acc):
    """Single-chunk path: stream tiles, fully fused scalar epilogue.

    w_ref    : SMEM (1,)  f32  -- raw mse_weight (pre-sigmoid)
    pred_ref : VMEM (tile_rows, 128), native dtype
    targ_ref : VMEM (tile_rows, 128), native dtype
    loss_ref : SMEM (1, 1) f32 -- final scalar loss
    abs_acc, sq_acc : VMEM (1, 128) f32 per-lane accumulators (scratch)
    """
    t = pl.program_id(0)

    @pl.when(t == 0)
    def _():
        abs_acc[...] = jnp.zeros_like(abs_acc)
        sq_acc[...] = jnp.zeros_like(sq_acc)

    # Cast in-kernel so the HBM DMA streams at the input's native width.
    d = pred_ref[...].astype(jnp.float32) - targ_ref[...].astype(jnp.float32)

    def add_fn(dv):
        abs_acc[...] += jnp.sum(jnp.abs(dv), axis=0, keepdims=True)
        sq_acc[...] += jnp.sum(dv * dv, axis=0, keepdims=True)

    _masked_accumulate(d, rows, tile_rows, t * tile_rows, needs_mask, add_fn)

    @pl.when(t == pl.num_programs(0) - 1)
    def _():
        # sigmoid(w) broadcast over lanes (EUP), per-lane mix (VPU), then one
        # cross-lane reduce (XLU, idle slot) and a scalar scale -> SMEM out.
        s = jax.nn.sigmoid(jnp.full((1, _LANE), w_ref[0], dtype=jnp.float32))
        mix = (1.0 - s) * abs_acc[...] + s * sq_acc[...]
        loss_ref[0, 0] = jnp.sum(mix) * inv_n


def _partial_sums_kernel(rows, tile_rows, tiles_per_chunk, needs_mask,
                         pred_ref, targ_ref, abs_out, sq_out):
    """Chunked path (2-TC chips / ragged grids): per-lane partials per chunk."""
    c = pl.program_id(0)   # chunk axis ("parallel": split across TensorCores)
    t = pl.program_id(1)   # tile axis within chunk ("arbitrary": reduction)

    @pl.when(t == 0)
    def _():
        abs_out[...] = jnp.zeros_like(abs_out)
        sq_out[...] = jnp.zeros_like(sq_out)

    d = pred_ref[...].astype(jnp.float32) - targ_ref[...].astype(jnp.float32)

    def add_fn(dv):
        abs_out[0] += jnp.sum(jnp.abs(dv), axis=0, keepdims=True)
        sq_out[0] += jnp.sum(dv * dv, axis=0, keepdims=True)

    tile_start = (c * tiles_per_chunk + t) * tile_rows
    _masked_accumulate(d, rows, tile_rows, tile_start, needs_mask, add_fn)


def mae_and_mse_loss(pred, target, mse_weight):
    """JAX/Pallas equivalent of MaeAndMseLoss.forward. Returns an f32 scalar."""
    assert pred.shape == target.shape
    n_elems = pred.size
    w = jnp.asarray(mse_weight, dtype=jnp.float32).reshape(-1)[:1]

    flat_p = pred.reshape(-1)
    flat_t = target.reshape(-1)
    rows = n_elems // _LANE
    rem = n_elems % _LANE
    inv_n = float(1.0 / n_elems)

    if rows == 0:
        # Tiny input (< 128 elements): nothing worth streaming.
        d = flat_p.astype(jnp.float32) - flat_t.astype(jnp.float32)
        s = jax.nn.sigmoid(w[0])
        return (1.0 - s) * jnp.mean(jnp.abs(d)) + s * jnp.mean(d * d)

    itemsize = min(jnp.dtype(pred.dtype).itemsize,
                   jnp.dtype(target.dtype).itemsize)
    tile_rows = _tile_rows_for(rows, itemsize)
    n_tiles = pl.cdiv(rows, tile_rows)

    num_tc = _num_tensorcores()
    n_chunks = num_tc if (num_tc > 1 and n_tiles >= 2) else 1

    if rem == 0:
        # Free contiguous reshape: no pad, no copy, no dtype cast.
        p2 = flat_p.reshape(rows, _LANE)
        t2 = flat_t.reshape(rows, _LANE)
    else:
        # Ragged (<128-elem) tail: stream only the full rows; the tail is
        # folded in with a tiny jnp computation below (no whole-array pad).
        # TODO(synk): the prefix slice may still copy; a BoundedSlice last
        # block would avoid it at the cost of an extra lane mask.
        p2 = flat_p[: rows * _LANE].reshape(rows, _LANE)
        t2 = flat_t[: rows * _LANE].reshape(rows, _LANE)

    if n_chunks == 1 and rem == 0:
        # ---- Fully fused path: one pallas_call, scalar SMEM output. ----
        needs_mask = (rows % tile_rows) != 0
        kernel = functools.partial(
            _fused_loss_kernel, rows, tile_rows, inv_n, needs_mask)
        loss = pl.pallas_call(
            kernel,
            out_shape=jax.ShapeDtypeStruct((1, 1), jnp.float32),
            grid_spec=pltpu.PrefetchScalarGridSpec(
                num_scalar_prefetch=0,
                grid=(n_tiles,),
                in_specs=[
                    pl.BlockSpec(memory_space=pltpu.MemorySpace.SMEM),    # w
                    pl.BlockSpec((tile_rows, _LANE), lambda t: (t, 0)),   # pred
                    pl.BlockSpec((tile_rows, _LANE), lambda t: (t, 0)),   # targ
                ],
                out_specs=pl.BlockSpec(memory_space=pltpu.MemorySpace.SMEM),
                scratch_shapes=[pltpu.VMEM((1, _LANE), jnp.float32),
                                pltpu.VMEM((1, _LANE), jnp.float32)],
            ),
            compiler_params=pltpu.CompilerParams(
                dimension_semantics=("arbitrary",),
            ),
        )(w, p2, t2)
        return loss[0, 0]

    # ---- Chunked path (2-TC chips and/or ragged tail): per-lane partials. ----
    tiles_per_chunk = pl.cdiv(n_tiles, n_chunks)
    last_block = n_tiles - 1
    padded_grid = (n_chunks * tiles_per_chunk) != n_tiles
    needs_mask = padded_grid or (rows % tile_rows) != 0

    if padded_grid:
        # Clamped index so no DMA addresses past the array; the padding tile's
        # contribution is masked to zero in-kernel.
        def in_index_map(c, t):
            return (jnp.minimum(c * tiles_per_chunk + t, last_block), 0)
    else:
        def in_index_map(c, t):
            return (c * tiles_per_chunk + t, 0)

    kernel = functools.partial(
        _partial_sums_kernel, rows, tile_rows, tiles_per_chunk, needs_mask)

    abs_part, sq_part = pl.pallas_call(
        kernel,
        out_shape=(
            jax.ShapeDtypeStruct((n_chunks, 1, _LANE), jnp.float32),
            jax.ShapeDtypeStruct((n_chunks, 1, _LANE), jnp.float32),
        ),
        grid_spec=pltpu.PrefetchScalarGridSpec(
            num_scalar_prefetch=0,
            grid=(n_chunks, tiles_per_chunk),
            in_specs=[
                pl.BlockSpec((tile_rows, _LANE), in_index_map),   # pred
                pl.BlockSpec((tile_rows, _LANE), in_index_map),   # target
            ],
            out_specs=(
                pl.BlockSpec((1, 1, _LANE), lambda c, t: (c, 0, 0)),
                pl.BlockSpec((1, 1, _LANE), lambda c, t: (c, 0, 0)),
            ),
        ),
        compiler_params=pltpu.CompilerParams(
            dimension_semantics=("parallel", "arbitrary"),
        ),
    )(p2, t2)

    abs_total = jnp.sum(abs_part)
    sq_total = jnp.sum(sq_part)
    if rem:
        td = (flat_p[rows * _LANE:].astype(jnp.float32)
              - flat_t[rows * _LANE:].astype(jnp.float32))
        abs_total = abs_total + jnp.sum(jnp.abs(td))
        sq_total = sq_total + jnp.sum(td * td)

    s = jax.nn.sigmoid(w[0])
    mae = abs_total * jnp.float32(inv_n)
    mse = sq_total * jnp.float32(inv_n)
    return (1.0 - s) * mae + s * mse


def _reference(pred, target, mse_weight):
    d = pred.astype(jnp.float32) - target.astype(jnp.float32)
    mae = jnp.mean(jnp.abs(d))
    mse = jnp.mean(d * d)
    s = jax.nn.sigmoid(jnp.asarray(mse_weight, jnp.float32).reshape(-1)[0])
    return (1.0 - s) * mae + s * mse


if __name__ == "__main__":
    key = jax.random.PRNGKey(0)
    k1, k2 = jax.random.split(key)

    # NCHW inputs, like the PyTorch module would typically receive.
    pred = jax.random.normal(k1, (2, 4, 16, 16), dtype=jnp.float32)
    target = jax.random.normal(k2, (2, 4, 16, 16), dtype=jnp.float32)

    # Deterministic parameter init matching nn.Parameter(torch.tensor([0.5])).
    mse_weight = jnp.array([0.5], dtype=jnp.float32)

    loss = jax.block_until_ready(mae_and_mse_loss(pred, target, mse_weight))
    ref = jax.block_until_ready(_reference(pred, target, mse_weight))

    assert jnp.allclose(loss, ref, rtol=1e-5, atol=1e-5), (loss, ref)
    print("KERNEL_OK")
</pallas_src>

<mosaic_0001>
module attributes {stable_mosaic.version = 11 : i64} {
  func.func @_fused_loss_kernel(%arg0: i32, %arg1: memref<1xf32, #tpu.memory_space<smem>>, %arg2: memref<16x128xf32, #tpu.memory_space<vmem>>, %arg3: memref<16x128xf32, #tpu.memory_space<vmem>>, %arg4: memref<1x1xf32, #tpu.memory_space<smem>>, %arg5: memref<1x128xf32, #tpu.memory_space<vmem>>, %arg6: memref<1x128xf32, #tpu.memory_space<vmem>>) attributes {dimension_semantics = [#tpu.dimension_semantics<arbitrary>], iteration_bounds = array<i64: 1>, scalar_prefetch = 0 : i64, scratch_operands = 2 : i64, tpu.core_type = #tpu.core_type<tc>, window_params = [{transform_indices = @transform_0, window_bounds = array<i64: 1>}, {transform_indices = @transform_1, window_bounds = array<i64: 16, 128>}, {transform_indices = @transform_2, window_bounds = array<i64: 16, 128>}, {transform_indices = @transform_3, window_bounds = array<i64: 1, 1>}]} {
    %c0_i32 = arith.constant 0 : i32
    %0 = arith.cmpi eq, %arg0, %c0_i32 : i32
    %1 = arith.extui %0 : i1 to i32
    %c0_i32_0 = arith.constant 0 : i32
    %2 = arith.cmpi ne, %1, %c0_i32_0 : i32
    scf.if %2 {
      %cst_15 = arith.constant 0.000000e+00 : f32
      %21 = vector.broadcast %cst_15 : f32 to vector<1x128xf32>
      %c0_16 = arith.constant 0 : index
      %c0_17 = arith.constant 0 : index
      %22 = vector.load %arg5[%c0_16, %c0_17] : memref<1x128xf32, #tpu.memory_space<vmem>>, vector<1x128xf32>
      tpu.vector_store %arg5[%c0_16, %c0_17], %21 {strides = array<i32>} : memref<1x128xf32, #tpu.memory_space<vmem>>, vector<1x128xf32>,
      %cst_18 = arith.constant 0.000000e+00 : f32
      %23 = vector.broadcast %cst_18 : f32 to vector<1x128xf32>
      %c0_19 = arith.constant 0 : index
      %c0_20 = arith.constant 0 : index
      %24 = vector.load %arg6[%c0_19, %c0_20] : memref<1x128xf32, #tpu.memory_space<vmem>>, vector<1x128xf32>
      tpu.vector_store %arg6[%c0_19, %c0_20], %23 {strides = array<i32>} : memref<1x128xf32, #tpu.memory_space<vmem>>, vector<1x128xf32>,
    } else {
    }
    %c0 = arith.constant 0 : index
    %c0_1 = arith.constant 0 : index
    %3 = vector.load %arg2[%c0, %c0_1] : memref<16x128xf32, #tpu.memory_space<vmem>>, vector<16x128xf32>
    %c0_2 = arith.constant 0 : index
    %c0_3 = arith.constant 0 : index
    %4 = vector.load %arg3[%c0_2, %c0_3] : memref<16x128xf32, #tpu.memory_space<vmem>>, vector<16x128xf32>
    %5 = arith.subf %3, %4 : vector<16x128xf32>
    %c0_4 = arith.constant 0 : index
    %c0_5 = arith.constant 0 : index
    %6 = vector.load %arg5[%c0_4, %c0_5] : memref<1x128xf32, #tpu.memory_space<vmem>>, vector<1x128xf32>
    %7 = math.absf %5 : vector<16x128xf32>
    %cst = arith.constant dense<0.000000e+00> : vector<128xf32>
    %8 = vector.multi_reduction <add>, %7, %cst [0] : vector<16x128xf32> to vector<128xf32>
    %9 = vector.shape_cast %8 : vector<128xf32> to vector<1x128xf32>
    %10 = arith.addf %6, %9 : vector<1x128xf32>
    %c0_6 = arith.constant 0 : index
    %c0_7 = arith.constant 0 : index
    %11 = vector.load %arg5[%c0_6, %c0_7] : memref<1x128xf32, #tpu.memory_space<vmem>>, vector<1x128xf32>
    tpu.vector_store %arg5[%c0_6, %c0_7], %10 {strides = array<i32>} : memref<1x128xf32, #tpu.memory_space<vmem>>, vector<1x128xf32>,
    %c0_8 = arith.constant 0 : index
    %c0_9 = arith.constant 0 : index
    %12 = vector.load %arg6[%c0_8, %c0_9] : memref<1x128xf32, #tpu.memory_space<vmem>>, vector<1x128xf32>
    %13 = arith.mulf %5, %5 : vector<16x128xf32>
    %cst_10 = arith.constant dense<0.000000e+00> : vector<128xf32>
    %14 = vector.multi_reduction <add>, %13, %cst_10 [0] : vector<16x128xf32> to vector<128xf32>
    %15 = vector.shape_cast %14 : vector<128xf32> to vector<1x128xf32>
    %16 = arith.addf %12, %15 : vector<1x128xf32>
    %c0_11 = arith.constant 0 : index
    %c0_12 = arith.constant 0 : index
    %17 = vector.load %arg6[%c0_11, %c0_12] : memref<1x128xf32, #tpu.memory_space<vmem>>, vector<1x128xf32>
    tpu.vector_store %arg6[%c0_11, %c0_12], %16 {strides = array<i32>} : memref<1x128xf32, #tpu.memory_space<vmem>>, vector<1x128xf32>,
    %c0_i32_13 = arith.constant 0 : i32
    %18 = arith.cmpi eq, %arg0, %c0_i32_13 : i32
    %19 = arith.extui %18 : i1 to i32
    %c0_i32_14 = arith.constant 0 : i32
    %20 = arith.cmpi ne, %19, %c0_i32_14 : i32
    scf.if %20 {
      %c0_15 = arith.constant 0 : index
      %21 = memref.load %arg1[%c0_15] : memref<1xf32, #tpu.memory_space<smem>>
      %22 = vector.broadcast %21 : f32 to vector<1x128xf32>
      %23 = arith.negf %22 : vector<1x128xf32>
      %24 = math.exp %23 : vector<1x128xf32>
      %cst_16 = arith.constant 1.000000e+00 : f32
      %25 = vector.broadcast %cst_16 : f32 to vector<1x128xf32>
      %26 = arith.addf %25, %24 : vector<1x128xf32>
      %27 = arith.divf %25, %26 : vector<1x128xf32>
      %cst_17 = arith.constant 1.000000e+00 : f32
      %28 = vector.broadcast %cst_17 : f32 to vector<1x128xf32>
      %29 = arith.subf %28, %27 : vector<1x128xf32>
      %c0_18 = arith.constant 0 : index
      %c0_19 = arith.constant 0 : index
      %30 = vector.load %arg5[%c0_18, %c0_19] : memref<1x128xf32, #tpu.memory_space<vmem>>, vector<1x128xf32>
      %31 = arith.mulf %29, %30 : vector<1x128xf32>
      %c0_20 = arith.constant 0 : index
      %c0_21 = arith.constant 0 : index
      %32 = vector.load %arg6[%c0_20, %c0_21] : memref<1x128xf32, #tpu.memory_space<vmem>>, vector<1x128xf32>
      %33 = arith.mulf %27, %32 : vector<1x128xf32>
      %34 = arith.addf %31, %33 : vector<1x128xf32>
      %35 = vector.shape_cast %34 : vector<1x128xf32> to vector<1x1x128xf32>
      %cst_22 = arith.constant dense<0.000000e+00> : vector<1xf32>
      %36 = vector.multi_reduction <add>, %35, %cst_22 [1, 2] : vector<1x1x128xf32> to vector<1xf32>
      %37 = vector.shape_cast %36 : vector<1xf32> to vector<1x1x1xf32>
      %38 = vector.extract %37[0, 0, 0] : f32 from vector<1x1x1xf32>
      %cst_23 = arith.constant 4.8828125E-4 : f32
      %39 = arith.mulf %38, %cst_23 : f32
      %c0_24 = arith.constant 0 : index
      %c0_25 = arith.constant 0 : index
      %40 = memref.load %arg4[%c0_24, %c0_25] : memref<1x1xf32, #tpu.memory_space<smem>>
      memref.store %39, %arg4[%c0_24, %c0_25] : memref<1x1xf32, #tpu.memory_space<smem>>
    } else {
    }
    return
  }
  func.func @transform_0(%arg0: i32) -> i32 {
    %c0_i32 = arith.constant 0 : i32
    %c0_i32_0 = arith.constant 0 : i32
    return %c0_i32 : i32
  }
  func.func @transform_1(%arg0: i32) -> (i32, i32) {
    %c0_i32 = arith.constant 0 : i32
    %c0_i32_0 = arith.constant 0 : i32
    return %arg0, %c0_i32 : i32, i32
  }
  func.func @transform_2(%arg0: i32) -> (i32, i32) {
    %c0_i32 = arith.constant 0 : i32
    %c0_i32_0 = arith.constant 0 : i32
    return %arg0, %c0_i32 : i32, i32
  }
  func.func @transform_3(%arg0: i32) -> (i32, i32) {
    %c0_i32 = arith.constant 0 : i32
    %c0_i32_0 = arith.constant 0 : i32
    %c0_i32_1 = arith.constant 0 : i32
    return %c0_i32, %c0_i32_0 : i32, i32
  }
}

</mosaic_0001>

<llo_original>
// kernel: tpu_custom_call.1
$region0: #{tpu_custom_call.1}
  #allocation0 [shape = 'u32[]', space=smem, size = 0x4, offset = 0x4, fixed_abs, tag = 'smem constant byte address 0x4 - core index']
  #allocation1 [shape = 'u32[144,128]{1,0:T(1,128)}', space=vmem, size = 0x12000, scoped, tag = 'internal scratch']
  #allocation2 [shape = 'f32[1,128]{1,0:T(1,128)}', space=vmem, size = 0x200, scoped, tag = 'scratch operand']
  #allocation3 [shape = 'f32[1,128]{1,0:T(1,128)}', space=vmem, size = 0x200, scoped, tag = 'scratch operand']
  #allocation4 [shape = 'f32[1]{0:T(128)S(6)}', space=smem, size = 0x200, scoped, tag = 'scoped memory for tpu_custom_call.1']
  %s0 = inlined_call_operand.<no memory space> [shape: f32[1], index: 0, kind: input, shape index: {}]
  %s1 = inlined_call_operand.hbm [shape: f32[16,128], index: 1, kind: input, shape index: {}]
  %s2 = inlined_call_operand.hbm [shape: f32[16,128], index: 2, kind: input, shape index: {}]
  %s3 = inlined_call_operand.hbm [shape: f32[1,1], index: 3, kind: output, shape index: {}]
  %s4 = sld [smem:[#allocation0]]
  $region38: #{tpu_custom_call.1} parent=0
    _
  %s6 = ssub.s32 1, %s4
  %s7 = scalar_select 0, %s6, %s4
  %8 = sst [smem:[#allocation4]] %s0
  $region1: #{tpu_custom_call.1} parent=0
    #allocation5 [shape = 'u8[8192]{0}', space=vmem, size = 0x2000, scoped, tag = 'input window, operand 1, single buffered']
    #allocation6 [shape = 's32[1]{0}', space=sflag, size = 0x4, scoped, tag = 'scoped memory for tpu_custom_call.1']
    #allocation7 [shape = 's32[1]{0}', space=sflag, size = 0x4, scoped, tag = 'scoped memory for tpu_custom_call.1']
    #allocation8 [shape = 'u8[8192]{0}', space=vmem, size = 0x2000, scoped, tag = 'input window, operand 2, single buffered']
    #allocation9 [shape = 's32[1]{0}', space=sflag, size = 0x4, scoped, tag = 'scoped memory for tpu_custom_call.1']
    #allocation10 [shape = 'u8[512]{0}', space=smem, size = 0x200, scoped, tag = 'output window, operand 0, single buffered']
    %9 = vsyncpa [#allocation6], 0
    %10 = vsyncpa [#allocation9], 0
    %11 = vsyncpa [#allocation7], 0
    // Predicated region
    $region2: #{tpu_custom_call.1} parent=1 // pred_check
      _
    $region3: #{tpu_custom_call.1} parent=1 // pred_check_branch
      %13 = sbr.rel (0) target = $region5
    $region4: #{tpu_custom_call.1} parent=1 // pred_region
      _
    $region5: #{tpu_custom_call.1} parent=1 // pred_fallthru
      _
    // Predicated region
    $region6: #{tpu_custom_call.1} parent=1 // pred_check
      _
    $region7: #{tpu_custom_call.1} parent=1 // pred_check_branch
      %15 = sbr.rel (0) target = $region9
    $region8: #{tpu_custom_call.1} parent=1 // pred_region
      %s17 = ssub.s32 256, 256
      %18 = vsyncadd [#allocation6], %s17
      %s19 = sshll.u32 [#allocation5], 4
      %s20 = int_to_ptr.vmem [resolvable:$true] %s19
      %25 = dma.hbm_to_vmem [thread:$0]  %s1, 256, %s20, [#allocation6], 128, 128, 8
    $region9: #{tpu_custom_call.1} parent=1 // pred_fallthru
      _
    // Predicated region
    $region10: #{tpu_custom_call.1} parent=1 // pred_check
      _
    $region11: #{tpu_custom_call.1} parent=1 // pred_check_branch
      %27 = sbr.rel (0) target = $region13
    $region12: #{tpu_custom_call.1} parent=1 // pred_region
      %s29 = ssub.s32 256, 256
      %30 = vsyncadd [#allocation9], %s29
      %s31 = sshll.u32 [#allocation8], 4
      %s32 = int_to_ptr.vmem [resolvable:$true] %s31
      %37 = dma.hbm_to_vmem [thread:$0]  %s2, 256, %s32, [#allocation9], 128, 128, 8
    $region13: #{tpu_custom_call.1} parent=1 // pred_fallthru
      _
    // Predicated region
    $region14: #{tpu_custom_call.1} parent=1 // pred_check
      _
    $region15: #{tpu_custom_call.1} parent=1 // pred_check_branch
      %39 = sbr.rel (0) target = $region17
    $region16: #{tpu_custom_call.1} parent=1 // pred_region
      %40 = dma.done [#allocation6], 256
    $region17: #{tpu_custom_call.1} parent=1 // pred_fallthru
      _
    // Predicated region
    $region18: #{tpu_custom_call.1} parent=1 // pred_check
      _
    $region19: #{tpu_custom_call.1} parent=1 // pred_check_branch
      %42 = sbr.rel (0) target = $region21
    $region20: #{tpu_custom_call.1} parent=1 // pred_region
      %43 = dma.done [#allocation9], 256
    $region21: #{tpu_custom_call.1} parent=1 // pred_fallthru
      _
    %p44 = scmp.eq.s32.totalorder 0, 0
    // Predicated region
    $region22: #{tpu_custom_call.1} parent=1 // pred_check
      %p45 = pneg %p44
    $region23: #{tpu_custom_call.1} parent=1 // pred_check_branch
      %47 = sbr.rel (%p45) target = $region25
    $region24: #{tpu_custom_call.1} parent=1 // pred_region
      %48 = vst [vmem:[#allocation2] sm:$0x1] 0.0
      %49 = vst [vmem:[#allocation3] sm:$0x1] 0.0
    $region25: #{tpu_custom_call.1} parent=1 // pred_fallthru
      _
    %v50 = vld [vmem:[#allocation5] sm:$0xff]
    %v51 = vld [vmem:[#allocation5 + $0x8] sm:$0xff]
    %v52 = vld [vmem:[#allocation8] sm:$0xff]
    %v53 = vld [vmem:[#allocation8 + $0x8] sm:$0xff]
    %v54 = vsub.f32 %v50, %v52
    %v55 = vsub.f32 %v51, %v53
    %v56 = vld [vmem:[#allocation2] sm:$0x1]
    %v57 = vand.u32 2147483647, %v54
    %v58 = vand.u32 2147483647, %v55
    %v59 = vadd.f32 %v57, %v58
    %v60 = vrot.slane %v59, 4
    %v61 = vadd.f32 %v59, %v60
    %v62 = vrot.slane %v61, 2
    %v63 = vadd.f32 %v61, %v62
    %v64 = vrot.slane %v63, 1
    %v65 = vadd.f32 %v63, %v64
    %v66 = vadd.f32 %v56, %v65
    %67 = vst [vmem:[#allocation2] sm:$0x1] %v66
    %v68 = vld [vmem:[#allocation3] sm:$0x1]
    %v69 = vmul.f32 %v54, %v54
    %v70 = vmul.f32 %v55, %v55
    %v71 = vadd.f32 %v69, %v70
    %v72 = vrot.slane %v71, 4
    %v73 = vadd.f32 %v71, %v72
    %v74 = vrot.slane %v73, 2
    %v75 = vadd.f32 %v73, %v74
    %v76 = vrot.slane %v75, 1
    %v77 = vadd.f32 %v75, %v76
    %v78 = vadd.f32 %v68, %v77
    %79 = vst [vmem:[#allocation3] sm:$0x1] %v78
    // Predicated region
    $region26: #{tpu_custom_call.1} parent=1 // pred_check
      %p80 = pneg %p44
    $region27: #{tpu_custom_call.1} parent=1 // pred_check_branch
      %82 = sbr.rel (%p80) target = $region29
    $region28: #{tpu_custom_call.1} parent=1 // pred_region
      %s83 = sld [smem:[#allocation4]]
      %v84 = vstv %s83
      %v85 = vxor.u32 %v84, 2147483648
      %v86 = vmul.f32 %v85, 1.442695
      %v87 = vpow.pop %v86
      %v88 = vadd.f32 %v87, 1.0
      %v89 = vrcp.pop %v88
      %v90 = vmul.f32 1.0, %v89
      %v91 = vsub.f32 1.0, %v90
      %v92 = vld [vmem:[#allocation2] sm:$0x1]
      %v93 = vmul.f32 %v91, %v92
      %v94 = vld [vmem:[#allocation3] sm:$0x1]
      %v95 = vmul.f32 %v90, %v94
      %v96 = vadd.f32 %v93, %v95
      %vm97 = vcmask 1040384
      %v98 = vsel %vm97, %v96, 0.0
      %99 = vadd.xlane.f32.xlu0 %v98
      %v100 = vpop.xlane.xlu0 %99
      %v101 = vrot.slane %v100, 4
      %v102 = vadd.f32 %v100, %v101
      %v103 = vrot.slane %v102, 2
      %v104 = vadd.f32 %v102, %v103
      %v105 = vrot.slane %v104, 1
      %v106 = vadd.f32 %v104, %v105
      %s107 = vtos %v106
      %s108 = smul.f32 %s107, 0.00048828125
      %s109 = scalar_lea.smem [#allocation10], 0
      %110 = sst [smem:[%s109]] %s108
    $region29: #{tpu_custom_call.1} parent=1 // pred_fallthru
      _
    // Predicated region
    $region30: #{tpu_custom_call.1} parent=1 // pred_check
      _
    $region31: #{tpu_custom_call.1} parent=1 // pred_check_branch
      %112 = sbr.rel (0) target = $region33
    $region32: #{tpu_custom_call.1} parent=1 // pred_region
      %s114 = ssub.s32 16, 16
      %115 = vsyncadd [#allocation7], %s114
      %118 = dma.smem_to_hbm [#allocation10], 16, %s3, [#allocation7]
    $region33: #{tpu_custom_call.1} parent=1 // pred_fallthru
      _
    // Predicated region
    $region34: #{tpu_custom_call.1} parent=1 // pred_check
      _
    $region35: #{tpu_custom_call.1} parent=1 // pred_check_branch
      %120 = sbr.rel (0) target = $region37
    $region36: #{tpu_custom_call.1} parent=1 // pred_region
      %121 = dma.done [#allocation7], 16
    $region37: #{tpu_custom_call.1} parent=1 // pred_fallthru
      _
    %122 = sfence
    %123 = vsyncpa [#allocation6], 1
    %124 = vsyncpa [#allocation9], 1
    %125 = vsyncpa [#allocation7], 1

</llo_original>
